<compile_context>
chip_gen: v7x
topology: tpu7x:2x2x1
jax: 0.10.0
libtpu: 0.0.40
codegen_flags: <defaults>
</compile_context>

<pallas_src>
import jax
import jax.numpy as jnp
from jax.experimental import pallas as pl
from jax.experimental.pallas import tpu as pltpu

_LANES = 128
# (1024, 128) f32 block = 512 KiB; 3 arrays x 2 double-buffers ~= 3 MiB VMEM,
# well under the 16/32/32 MiB scoped defaults on v5e/v6e/v7x.
_MAX_BLOCK_ROWS = 1024


def fusion_kernel(x_ref, y_ref, o_ref):
    # x_ref/y_ref/o_ref: (block_rows, 128) tiles, all same dtype.
    x = x_ref[...]
    y = y_ref[...]
    d = x - y
    s = x + y
    # -(x - y)**2 + relu(x + y)   (pure VPU work, overlaps with the DMA stream)
    o_ref[...] = jnp.maximum(s, jnp.zeros_like(s)) - d * d


def _round_up(n, m):
    return ((n + m - 1) // m) * m


def fusion(x, y):
    """Elementwise -(x - y)**2 + relu(x + y) for same-shaped x, y."""
    assert x.shape == y.shape, (x.shape, y.shape)
    out_dtype = jnp.result_type(x.dtype, y.dtype)
    orig_shape = x.shape
    total = x.size

    x_flat = x.reshape(-1).astype(out_dtype)
    y_flat = y.reshape(-1).astype(out_dtype)

    # Lane-dense 2-D layout: (rows, 128); pad rows so the grid tiles evenly.
    rows = pl.cdiv(total, _LANES)
    block_rows = min(_MAX_BLOCK_ROWS, _round_up(rows, 8))
    rows_padded = _round_up(rows, block_rows)
    padded_total = rows_padded * _LANES
    if padded_total != total:
        pad = padded_total - total
        x_flat = jnp.pad(x_flat, (0, pad))
        y_flat = jnp.pad(y_flat, (0, pad))

    x2d = x_flat.reshape(rows_padded, _LANES)
    y2d = y_flat.reshape(rows_padded, _LANES)

    grid = (rows_padded // block_rows,)
    itemsize = jnp.dtype(out_dtype).itemsize

    out2d = pl.pallas_call(
        fusion_kernel,
        out_shape=jax.ShapeDtypeStruct((rows_padded, _LANES), out_dtype),
        grid=grid,
        in_specs=[
            pl.BlockSpec((block_rows, _LANES), lambda i: (i, 0)),
            pl.BlockSpec((block_rows, _LANES), lambda i: (i, 0)),
        ],
        out_specs=pl.BlockSpec((block_rows, _LANES), lambda i: (i, 0)),
        compiler_params=pltpu.CompilerParams(
            dimension_semantics=("parallel",),
        ),
        cost_estimate=pl.CostEstimate(
            flops=5 * total,                      # sub, add, mul, max, sub
            transcendentals=0,
            bytes_accessed=3 * total * itemsize,  # read x, read y, write out
        ),
    )(x2d, y2d)

    return out2d.reshape(-1)[:total].reshape(orig_shape)


if __name__ == "__main__":
    key = jax.random.PRNGKey(0)
    kx, ky = jax.random.split(key)

    B, C, H, W = 2, 4, 16, 16  # small shapes consistent with the module
    x = jax.random.normal(kx, (B, C, H, W), dtype=jnp.float32)
    y = jax.random.normal(ky, (B, C, H, W), dtype=jnp.float32)

    out = fusion(x, y)
    out = jax.block_until_ready(out)

    # Cross-check against a plain-JAX reference of the same math.
    ref = -(x - y) ** 2 + jnp.maximum(x + y, 0.0)
    assert out.shape == ref.shape
    assert out.dtype == ref.dtype
    assert bool(jnp.allclose(out, ref, atol=1e-6, rtol=1e-6))

    print("KERNEL_OK")
</pallas_src>

<mosaic_0001>
module attributes {stable_mosaic.version = 11 : i64} {
  func.func @fusion_kernel(%arg0: i32, %arg1: memref<16x128xf32, #tpu.memory_space<vmem>>, %arg2: memref<16x128xf32, #tpu.memory_space<vmem>>, %arg3: memref<16x128xf32, #tpu.memory_space<vmem>>) attributes {dimension_semantics = [#tpu.dimension_semantics<parallel>], iteration_bounds = array<i64: 1>, scalar_prefetch = 0 : i64, scratch_operands = 0 : i64, tpu.core_type = #tpu.core_type<tc>, window_params = [{transform_indices = @transform_0, window_bounds = array<i64: 16, 128>}, {transform_indices = @transform_1, window_bounds = array<i64: 16, 128>}, {transform_indices = @transform_2, window_bounds = array<i64: 16, 128>}]} {
    %c0 = arith.constant 0 : index
    %c0_0 = arith.constant 0 : index
    %0 = vector.load %arg1[%c0, %c0_0] : memref<16x128xf32, #tpu.memory_space<vmem>>, vector<16x128xf32>
    %c0_1 = arith.constant 0 : index
    %c0_2 = arith.constant 0 : index
    %1 = vector.load %arg2[%c0_1, %c0_2] : memref<16x128xf32, #tpu.memory_space<vmem>>, vector<16x128xf32>
    %2 = arith.subf %0, %1 : vector<16x128xf32>
    %3 = arith.addf %0, %1 : vector<16x128xf32>
    %cst = arith.constant 0.000000e+00 : f32
    %4 = vector.broadcast %cst : f32 to vector<16x128xf32>
    %5 = arith.maximumf %3, %4 : vector<16x128xf32>
    %6 = arith.mulf %2, %2 : vector<16x128xf32>
    %7 = arith.subf %5, %6 : vector<16x128xf32>
    %c0_3 = arith.constant 0 : index
    %c0_4 = arith.constant 0 : index
    %8 = vector.load %arg3[%c0_3, %c0_4] : memref<16x128xf32, #tpu.memory_space<vmem>>, vector<16x128xf32>
    tpu.vector_store %arg3[%c0_3, %c0_4], %7 {strides = array<i32>} : memref<16x128xf32, #tpu.memory_space<vmem>>, vector<16x128xf32>,
    return
  }
  func.func @transform_0(%arg0: i32) -> (i32, i32) {
    %c0_i32 = arith.constant 0 : i32
    %c0_i32_0 = arith.constant 0 : i32
    return %arg0, %c0_i32 : i32, i32
  }
  func.func @transform_1(%arg0: i32) -> (i32, i32) {
    %c0_i32 = arith.constant 0 : i32
    %c0_i32_0 = arith.constant 0 : i32
    return %arg0, %c0_i32 : i32, i32
  }
  func.func @transform_2(%arg0: i32) -> (i32, i32) {
    %c0_i32 = arith.constant 0 : i32
    %c0_i32_0 = arith.constant 0 : i32
    return %arg0, %c0_i32 : i32, i32
  }
}

</mosaic_0001>

<llo_original>
// kernel: tpu_custom_call.1
$region0: #{tpu_custom_call.1}
  #allocation0 [shape = 'u32[]', space=smem, size = 0x4, offset = 0x4, fixed_abs, tag = 'smem constant byte address 0x4 - core index']
  #allocation1 [shape = 'u32[144,128]{1,0:T(1,128)}', space=vmem, size = 0x12000, scoped, tag = 'internal scratch']
  %s0 = inlined_call_operand.hbm [shape: f32[16,128], index: 0, kind: input, shape index: {}]
  %s1 = inlined_call_operand.hbm [shape: f32[16,128], index: 1, kind: input, shape index: {}]
  %s2 = inlined_call_operand.hbm [shape: f32[16,128], index: 2, kind: output, shape index: {}]
  %s3 = sld [smem:[#allocation0]]
  $region26: #{tpu_custom_call.1} parent=0
    _
  %s5 = ssub.s32 1, %s3
  %s6 = scalar_select 0, %s5, %s3
  $region1: #{tpu_custom_call.1} parent=0
    #allocation2 [shape = 'u8[8192]{0}', space=vmem, size = 0x2000, scoped, tag = 'input window, operand 0, single buffered']
    #allocation3 [shape = 's32[1]{0}', space=sflag, size = 0x4, scoped, tag = 'scoped memory for tpu_custom_call.1']
    #allocation4 [shape = 's32[1]{0}', space=sflag, size = 0x4, scoped, tag = 'scoped memory for tpu_custom_call.1']
    #allocation5 [shape = 'u8[8192]{0}', space=vmem, size = 0x2000, scoped, tag = 'input window, operand 1, single buffered']
    #allocation6 [shape = 's32[1]{0}', space=sflag, size = 0x4, scoped, tag = 'scoped memory for tpu_custom_call.1']
    #allocation7 [shape = 'u8[8192]{0}', space=vmem, size = 0x2000, scoped, tag = 'output window, operand 0, single buffered']
    %7 = vsyncpa [#allocation3], 0
    %8 = vsyncpa [#allocation6], 0
    %9 = vsyncpa [#allocation4], 0
    // Predicated region
    $region2: #{tpu_custom_call.1} parent=1 // pred_check
      _
    $region3: #{tpu_custom_call.1} parent=1 // pred_check_branch
      %11 = sbr.rel (0) target = $region5
    $region4: #{tpu_custom_call.1} parent=1 // pred_region
      %s13 = ssub.s32 256, 256
      %14 = vsyncadd [#allocation3], %s13
      %s15 = sshll.u32 [#allocation2], 4
      %s16 = int_to_ptr.vmem [resolvable:$true] %s15
      %21 = dma.hbm_to_vmem [thread:$0]  %s0, 256, %s16, [#allocation3], 128, 128, 8
    $region5: #{tpu_custom_call.1} parent=1 // pred_fallthru
      _
    // Predicated region
    $region6: #{tpu_custom_call.1} parent=1 // pred_check
      _
    $region7: #{tpu_custom_call.1} parent=1 // pred_check_branch
      %23 = sbr.rel (0) target = $region9
    $region8: #{tpu_custom_call.1} parent=1 // pred_region
      %s25 = ssub.s32 256, 256
      %26 = vsyncadd [#allocation6], %s25
      %s27 = sshll.u32 [#allocation5], 4
      %s28 = int_to_ptr.vmem [resolvable:$true] %s27
      %33 = dma.hbm_to_vmem [thread:$0]  %s1, 256, %s28, [#allocation6], 128, 128, 8
    $region9: #{tpu_custom_call.1} parent=1 // pred_fallthru
      _
    // Predicated region
    $region10: #{tpu_custom_call.1} parent=1 // pred_check
      _
    $region11: #{tpu_custom_call.1} parent=1 // pred_check_branch
      %35 = sbr.rel (0) target = $region13
    $region12: #{tpu_custom_call.1} parent=1 // pred_region
      %36 = dma.done [#allocation3], 256
    $region13: #{tpu_custom_call.1} parent=1 // pred_fallthru
      _
    // Predicated region
    $region14: #{tpu_custom_call.1} parent=1 // pred_check
      _
    $region15: #{tpu_custom_call.1} parent=1 // pred_check_branch
      %38 = sbr.rel (0) target = $region17
    $region16: #{tpu_custom_call.1} parent=1 // pred_region
      %39 = dma.done [#allocation6], 256
    $region17: #{tpu_custom_call.1} parent=1 // pred_fallthru
      _
    %v40 = vld [vmem:[#allocation2] sm:$0xff]
    %v41 = vld [vmem:[#allocation2 + $0x8] sm:$0xff]
    %v42 = vld [vmem:[#allocation5] sm:$0xff]
    %v43 = vld [vmem:[#allocation5 + $0x8] sm:$0xff]
    %v44 = vsub.f32 %v40, %v42
    %v45 = vsub.f32 %v41, %v43
    %v46 = vadd.f32 %v40, %v42
    %v47 = vadd.f32 %v41, %v43
    %v48 = vmax.f32 %v46, 0.0
    %v49 = vmax.f32 %v47, 0.0
    %v50 = vmul.f32 %v44, %v44
    %v51 = vmul.f32 %v45, %v45
    %v52 = vsub.f32 %v48, %v50
    %v53 = vsub.f32 %v49, %v51
    %54 = vst [vmem:[#allocation7] sm:$0xff] %v52
    %55 = vst [vmem:[#allocation7 + $0x8] sm:$0xff] %v53
    // Predicated region
    $region18: #{tpu_custom_call.1} parent=1 // pred_check
      _
    $region19: #{tpu_custom_call.1} parent=1 // pred_check_branch
      %57 = sbr.rel (0) target = $region21
    $region20: #{tpu_custom_call.1} parent=1 // pred_region
      %s59 = ssub.s32 256, 256
      %60 = vsyncadd [#allocation4], %s59
      %s61 = sshll.u32 [#allocation7], 4
      %s62 = int_to_ptr.vmem [resolvable:$true] %s61
      %67 = dma.vmem_to_hbm [thread:$0]  %s62, 256, %s2, [#allocation4], 128, 128, 8
    $region21: #{tpu_custom_call.1} parent=1 // pred_fallthru
      _
    // Predicated region
    $region22: #{tpu_custom_call.1} parent=1 // pred_check
      _
    $region23: #{tpu_custom_call.1} parent=1 // pred_check_branch
      %69 = sbr.rel (0) target = $region25
    $region24: #{tpu_custom_call.1} parent=1 // pred_region
      %70 = dma.done [#allocation4], 256
    $region25: #{tpu_custom_call.1} parent=1 // pred_fallthru
      _
    %71 = vsyncpa [#allocation3], 1
    %72 = vsyncpa [#allocation6], 1
    %73 = vsyncpa [#allocation4], 1

</llo_original>
